<compile_context>
chip_gen: v6e
topology: v6e:2x2x1
jax: 0.10.0
libtpu: 0.0.40
codegen_flags: <defaults>
</compile_context>

<pallas_src>
import functools

import jax
import jax.numpy as jnp
from jax.experimental import pallas as pl
from jax.experimental.pallas import tpu as pltpu


# ----------------------------- kernels --------------------------------------


def _preemphasis_full_t_kernel(x_ref, o_ref, *, coefficient):
    """One (bt, T) tile: whole time axis resident, no seams."""
    x = x_ref[...]                               # (bt, T)
    rolled = pltpu.roll(x, shift=1, axis=1)      # rolled[:, t] = x[:, t-1]; col 0 wraps
    o_ref[...] = x - coefficient * rolled
    # Reflect padding at column 0: x_pad[:, 0] == x[:, 1].
    o_ref[:, 0:1] = x[:, 0:1] - coefficient * x[:, 1:2]


def _preemphasis_tiled_t_kernel(x_ref, o_ref, carry_ref, *, coefficient):
    """(bt, tt) tiles along T; the t-1 halo crosses seams via carry_ref.

    NOTE: carry_ref is only correct because T is the LAST grid axis with
    "arbitrary" (sequential) dimension_semantics.  Do not make it parallel.
    """
    j = pl.program_id(1)

    x = x_ref[...]                               # (bt, tt)
    rolled = pltpu.roll(x, shift=1, axis=1)
    o_ref[...] = x - coefficient * rolled

    @pl.when(j == 0)
    def _():
        # Reflect padding: x_pad[:, 0] == x[:, 1].
        o_ref[:, 0:1] = x[:, 0:1] - coefficient * x[:, 1:2]

    @pl.when(j > 0)
    def _():
        # Halo: last sample of the previous T tile (same batch tile).
        o_ref[:, 0:1] = x[:, 0:1] - coefficient * carry_ref[...]

    # Stash this tile's last column for the next T tile.
    carry_ref[...] = x[:, x.shape[1] - 1:]


# --------------------------- tile selection ----------------------------------


def _physical_vmem_bytes():
    try:
        vmem = getattr(pltpu.get_tpu_info(), "vmem_capacity_bytes", None)
        if vmem:
            return int(vmem)
    except Exception:
        pass
    return 64 << 20  # conservative default: v7x per-TensorCore VMEM


def _select_config(B, T, itemsize, max_tile_bytes=None):
    """Returns (bt, tt, full_t, grid_t)."""
    if max_tile_bytes is None:
        # Double-buffered input + output => ~4x tile bytes live per core; keep
        # generous headroom: tile <= physical/16, capped at 8 MiB.
        max_tile_bytes = min(_physical_vmem_bytes() // 16, 8 << 20)

    # Candidate B tiles: multiple-of-8 divisors of B (sublane aligned, exact
    # grid), otherwise the full B dim (exempt from the divisibility rule).
    if B >= 8 and B % 8 == 0:
        bt_cands = [d for d in range(B, 0, -8) if B % d == 0]  # descending
    else:
        bt_cands = [B]
    # Keep >= 2 blocks on the "parallel" B axis when possible so v7x's second
    # TensorCore gets work (no effect on v5e/v6e).
    if B >= 16:
        multi = [d for d in bt_cands if B // d >= 2]
        if multi:
            bt_cands = multi

    # Preferred: full-T tiles — largest bt that fits the budget.
    for bt in bt_cands:
        if bt * T * itemsize <= max_tile_bytes:
            return bt, T, True, 1

    # Fallback: tile T.  Pick the largest bt that still allows >=512-lane
    # tiles (else the smallest candidate), then the biggest lane count.
    bt = bt_cands[-1]
    for cand in bt_cands:
        if cand * 512 * itemsize <= max_tile_bytes:
            bt = cand
            break
    cap_lanes = max(128, (max_tile_bytes // (bt * itemsize)) // 128 * 128)

    # Largest multiple-of-128 divisor of T under the cap -> exact grid.
    tt_exact = 0
    d = 128
    while d <= min(T, cap_lanes):
        if T % d == 0:
            tt_exact = d
        d += 128
    if tt_exact >= min(512, cap_lanes):
        return bt, tt_exact, False, T // tt_exact

    # No good exact divisor: ragged last tile via a cdiv grid (safe here).
    tt = min(cap_lanes, pl.cdiv(T, 128) * 128)
    return bt, tt, False, pl.cdiv(T, tt)


# ------------------------------ wrapper --------------------------------------


def preemphasis(x, coefficient=0.97, *, max_tile_bytes=None):
    assert x.ndim == 2, "PreEmphasis expects a 2-D (batch, time) input"
    B, T = x.shape
    assert T >= 2, "PreEmphasis needs T >= 2 for reflect padding"

    itemsize = jnp.dtype(x.dtype).itemsize
    bt, tt, full_t, grid_t = _select_config(B, T, itemsize, max_tile_bytes)
    grid_b = B // bt  # bt always divides B (or equals it)
    tile_bytes = bt * tt * itemsize
    # 2 buffers x (in + out) x tile + margin; covers v5e's 16 MiB default
    # scoped VMEM, stays far under every generation's physical VMEM.
    vmem_limit = int(4 * tile_bytes + (4 << 20))

    coefficient = float(coefficient)

    if full_t:
        kernel = functools.partial(_preemphasis_full_t_kernel,
                                   coefficient=coefficient)
        return pl.pallas_call(
            kernel,
            out_shape=jax.ShapeDtypeStruct((B, T), x.dtype),
            grid_spec=pltpu.PrefetchScalarGridSpec(
                num_scalar_prefetch=0,
                grid=(grid_b,),
                in_specs=[pl.BlockSpec((bt, T), lambda i: (i, 0))],
                out_specs=pl.BlockSpec((bt, T), lambda i: (i, 0)),
            ),
            compiler_params=pltpu.CompilerParams(
                dimension_semantics=("parallel",),
                vmem_limit_bytes=vmem_limit,
            ),
        )(x)

    kernel = functools.partial(_preemphasis_tiled_t_kernel,
                               coefficient=coefficient)
    return pl.pallas_call(
        kernel,
        out_shape=jax.ShapeDtypeStruct((B, T), x.dtype),
        grid_spec=pltpu.PrefetchScalarGridSpec(
            num_scalar_prefetch=0,
            grid=(grid_b, grid_t),
            in_specs=[pl.BlockSpec((bt, tt), lambda i, j: (i, j))],
            out_specs=pl.BlockSpec((bt, tt), lambda i, j: (i, j)),
            scratch_shapes=[pltpu.VMEM((bt, 1), x.dtype)],
        ),
        compiler_params=pltpu.CompilerParams(
            # T must stay the last, sequential axis: the carry scratch holds
            # the previous tile's final column.
            dimension_semantics=("parallel", "arbitrary"),
            vmem_limit_bytes=vmem_limit,
        ),
    )(x)


# ------------------------------ reference ------------------------------------


def _reference(x, coefficient=0.97):
    # Pure-JAX reference mirroring torch reflect-pad + conv1d([-c, 1]).
    shifted = jnp.concatenate([x[:, 1:2], x[:, :-1]], axis=1)
    return x - coefficient * shifted


if __name__ == "__main__":
    key = jax.random.PRNGKey(0)
    coefficient = 0.97

    # Case 1: default path -> full-T tile, 1-D "parallel" grid with 2 B blocks.
    x1 = jax.random.normal(key, (16, 1024), dtype=jnp.float32)
    # Case 2: tiny batch, full-dim blocks on both axes.
    x2 = jax.random.normal(jax.random.fold_in(key, 1), (2, 512), dtype=jnp.float32)
    # Case 3: force the T-tiled fallback with an exact 128-multiple divisor
    #         (carry across seams), via a tiny per-tile byte budget.
    x3 = jax.random.normal(jax.random.fold_in(key, 2), (8, 2048), dtype=jnp.float32)
    # Case 4: force the ragged pl.cdiv T grid (T has no 128-multiple divisor).
    x4 = jax.random.normal(jax.random.fold_in(key, 3), (8, 1200), dtype=jnp.float32)

    cases = [
        (x1, None),
        (x2, None),
        (x3, 8 * 512 * 4),   # budget -> bt=8, tt=512, exact grid of 4 T tiles
        (x4, 8 * 512 * 4),   # budget -> bt=8, tt=512, cdiv grid (512,512,176)
    ]

    for x, budget in cases:
        y = preemphasis(x, coefficient, max_tile_bytes=budget)
        y = jax.block_until_ready(y)
        y_ref = _reference(x, coefficient)
        assert y.shape == x.shape and y.dtype == x.dtype
        assert jnp.allclose(y, y_ref, atol=1e-6, rtol=1e-6)

    print("KERNEL_OK")
</pallas_src>

<mosaic_0001>
module attributes {stable_mosaic.version = 11 : i64} {
  func.func @_preemphasis_full_t_kernel(%arg0: i32, %arg1: memref<8x1024xf32, #tpu.memory_space<vmem>>, %arg2: memref<8x1024xf32, #tpu.memory_space<vmem>>) attributes {dimension_semantics = [#tpu.dimension_semantics<parallel>], iteration_bounds = array<i64: 2>, scalar_prefetch = 0 : i64, scratch_operands = 0 : i64, tpu.core_type = #tpu.core_type<tc>, window_params = [{transform_indices = @transform_0, window_bounds = array<i64: 8, 1024>}, {transform_indices = @transform_1, window_bounds = array<i64: 8, 1024>}]} {
    %c0 = arith.constant 0 : index
    %c0_0 = arith.constant 0 : index
    %0 = vector.load %arg1[%c0, %c0_0] : memref<8x1024xf32, #tpu.memory_space<vmem>>, vector<8x1024xf32>
    %c1_i32 = arith.constant 1 : i32
    %1 = tpu.dynamic_rotate %0 by %c1_i32 dim 1 : vector<8x1024xf32>, i32 -> vector<8x1024xf32>
    %cst = arith.constant 9.700000e-01 : f32
    %2 = vector.broadcast %cst : f32 to vector<8x1024xf32>
    %3 = arith.mulf %2, %1 : vector<8x1024xf32>
    %4 = arith.subf %0, %3 : vector<8x1024xf32>
    %c0_1 = arith.constant 0 : index
    %c0_2 = arith.constant 0 : index
    %5 = vector.load %arg2[%c0_1, %c0_2] : memref<8x1024xf32, #tpu.memory_space<vmem>>, vector<8x1024xf32>
    tpu.vector_store %arg2[%c0_1, %c0_2], %4 {strides = array<i32>} : memref<8x1024xf32, #tpu.memory_space<vmem>>, vector<8x1024xf32>,
    %6 = vector.extract_strided_slice %0 {offsets = [0, 0], sizes = [8, 1], strides = [1, 1]} : vector<8x1024xf32> to vector<8x1xf32>
    %7 = vector.extract_strided_slice %0 {offsets = [0, 1], sizes = [8, 1], strides = [1, 1]} : vector<8x1024xf32> to vector<8x1xf32>
    %cst_3 = arith.constant 9.700000e-01 : f32
    %8 = vector.broadcast %cst_3 : f32 to vector<8x1xf32>
    %9 = arith.mulf %8, %7 : vector<8x1xf32>
    %10 = arith.subf %6, %9 : vector<8x1xf32>
    %c0_4 = arith.constant 0 : index
    %c0_5 = arith.constant 0 : index
    %11 = vector.load %arg2[%c0_4, %c0_5] : memref<8x1024xf32, #tpu.memory_space<vmem>>, vector<8x1xf32>
    tpu.vector_store %arg2[%c0_4, %c0_5], %10 {strides = array<i32>} : memref<8x1024xf32, #tpu.memory_space<vmem>>, vector<8x1xf32>,
    return
  }
  func.func @transform_0(%arg0: i32) -> (i32, i32) {
    %c0_i32 = arith.constant 0 : i32
    %c0_i32_0 = arith.constant 0 : i32
    return %arg0, %c0_i32 : i32, i32
  }
  func.func @transform_1(%arg0: i32) -> (i32, i32) {
    %c0_i32 = arith.constant 0 : i32
    %c0_i32_0 = arith.constant 0 : i32
    return %arg0, %c0_i32 : i32, i32
  }
}

</mosaic_0001>

<llo_original>
// kernel: tpu_custom_call.1
$region0: #{tpu_custom_call.1}
  #allocation0 [shape = 'u32[]', space=smem, size = 0x4, offset = 0x4, fixed_abs, tag = 'smem constant byte address 0x4 - core index']
  #allocation1 [shape = 'u32[144,128]{1,0:T(1,128)}', space=vmem, size = 0x12000, scoped, tag = 'internal scratch']
  %s0 = inlined_call_operand.hbm [shape: f32[16,1024], index: 0, kind: input, shape index: {}]
  %s1 = inlined_call_operand.hbm [shape: f32[16,1024], index: 1, kind: output, shape index: {}]
  %s2 = sld [smem:[#allocation0]]
  $region41: #{tpu_custom_call.1} parent=0
    _
  %s4 = ssub.s32 1, %s2
  %s5 = scalar_select 0, %s4, %s2
  $region1: #{tpu_custom_call.1} parent=0
    #allocation2 [shape = 'u8[65536]{0}', space=vmem, size = 0x10000, scoped, tag = 'input window, operand 0']
    #allocation3 [shape = 's32[2]{0}', space=sflag, size = 0x8, scoped, tag = 'scoped memory for tpu_custom_call.1']
    #allocation4 [shape = 's32[2]{0}', space=sflag, size = 0x8, scoped, tag = 'scoped memory for tpu_custom_call.1']
    #allocation5 [shape = 'u8[65536]{0}', space=vmem, size = 0x10000, scoped, tag = 'output window, operand 0']
    %6 = vsyncpa [#allocation3], 0
    %s7 = scalar_lea.sflag [#allocation3], 1
    %8 = vsyncpa %s7, 0
    %9 = vsyncpa [#allocation4], 0
    %s10 = scalar_lea.sflag [#allocation4], 1
    %11 = vsyncpa %s10, 0
    loop: start=0, step=1, limit=4
    $region2: #{tpu_custom_call.1} parent=1 // loop_pre_header
      _
    $region3: #{tpu_custom_call.1} parent=1 // loop_header
      %s13 = sphi 0, %s17
      %p14 = scmp.ge.s32.totalorder %s13, 4
      %s23 = sphi 0, %s25
      %s26 = sphi 0, %s23
      %s27 = sphi 0, %s26
      %s43 = sphi 0, %s27
      %s49 = sphi 0, %s51
      %s52 = sphi 0, %s49
      %s53 = sphi 0, %s52
      %s69 = sphi 0, %s53
    $region4: #{tpu_custom_call.1} parent=1 // loop_header_branch
      %16 = sbr.rel (%p14) target = $region8
    $region5: #{tpu_custom_call.1} parent=1 // loop_body
      %s18 = ssub.s32 %s13, 1
      %s19 = ssub.s32 %s13, 2
      %s20 = sadd.s32 %s13, 1
      %s21 = ssub.s32 %s13, %s20
      %p22 = scmp.eq.s32.totalorder %s21, 0
      %s24 = sadd.s32 %s23, 1
      %s25 = scalar_select %p22, %s23, %s24
      %p28 = pneg %p22
      %p29 = scmp.eq.s32.totalorder %s13, 1
      %p30 = por %p28, %p29
      %p31 = scmp.ne.s32.totalorder %s23, %s26
      %p32 = scmp.eq.s32.totalorder %s13, 0
      %p33 = por %p31, %p32
      %p34 = scmp.ne.s32.totalorder %s23, %s26
      %p35 = scmp.eq.s32.totalorder %s18, 1
      %p36 = por %p34, %p35
      %p37 = scmp.ne.s32.totalorder %s26, %s27
      %p38 = scmp.eq.s32.totalorder %s18, 0
      %p39 = por %p37, %p38
      %p40 = scmp.ne.s32.totalorder %s26, %s27
      %p41 = scmp.eq.s32.totalorder %s19, 1
      %p42 = por %p40, %p41
      %p44 = scmp.ne.s32.totalorder %s27, %s43
      %p45 = scmp.eq.s32.totalorder %s19, 0
      %p46 = por %p44, %p45
      %s47 = ssub.s32 %s13, %s20
      %p48 = scmp.eq.s32.totalorder %s47, 0
      %s50 = sadd.s32 %s49, 1
      %s51 = scalar_select %p48, %s49, %s50
      %p54 = pneg %p48
      %p55 = scmp.eq.s32.totalorder %s13, 1
      %p56 = por %p54, %p55
      %p57 = scmp.ne.s32.totalorder %s49, %s52
      %p58 = scmp.eq.s32.totalorder %s13, 0
      %p59 = por %p57, %p58
      %p60 = scmp.ne.s32.totalorder %s49, %s52
      %p61 = scmp.eq.s32.totalorder %s18, 1
      %p62 = por %p60, %p61
      %p63 = scmp.ne.s32.totalorder %s52, %s53
      %p64 = scmp.eq.s32.totalorder %s18, 0
      %p65 = por %p63, %p64
      %p66 = scmp.ne.s32.totalorder %s52, %s53
      %p67 = scmp.eq.s32.totalorder %s19, 1
      %p68 = por %p66, %p67
      %p70 = scmp.ne.s32.totalorder %s53, %s69
      %p71 = scmp.eq.s32.totalorder %s19, 0
      %p72 = por %p70, %p71
      %p73 = scmp.le.s32.totalorder 1, %s13
      %p74 = scmp.lt.s32.totalorder %s13, 3
      %p75 = pnand %p73, %p74
      %p76 = pneg %p75
      // Predicated region
      $region9: #{tpu_custom_call.1} parent=5 // pred_check
        _
      $region10: #{tpu_custom_call.1} parent=5 // pred_check_branch
        %78 = sbr.rel (%p75) target = $region12
      $region11: #{tpu_custom_call.1} parent=5 // pred_region
        %s79 = ssub.s32 %s13, 1
      $region12: #{tpu_custom_call.1} parent=5 // pred_fallthru
        _
      %p80 = scmp.lt.s32.totalorder %s13, 2
      // Predicated region
      $region13: #{tpu_custom_call.1} parent=5 // pred_check
        %p81 = pneg %p80
      $region14: #{tpu_custom_call.1} parent=5 // pred_check_branch
        %83 = sbr.rel (%p81) target = $region16
      $region15: #{tpu_custom_call.1} parent=5 // pred_region
        // Predicated region
        $region17: #{tpu_custom_call.1} parent=15 // pred_check
          %p84 = pneg %p33
        $region18: #{tpu_custom_call.1} parent=15 // pred_check_branch
          %86 = sbr.rel (%p84) target = $region20
        $region19: #{tpu_custom_call.1} parent=15 // pred_region
          %s87 = sand.u32 %s23, 1
          %s88 = scalar_lea.sflag [#allocation3], %s87
          %s89 = sand.u32 %s23, 1
          %s90 = smul.addr %s89, 64
          %s91 = scalar_lea.vmem [#allocation2], %s90
          %s93 = ssub.s32 1024, 1024
          %94 = vsyncadd %s88, %s93
          %s95 = smul.addr %s13, 8
          %s96 = smul.addr %s95, 128
          %s97 = scalar_lea.hbm %s0, %s96
          %s99 = sshll.u32 %s91, 4
          %s100 = int_to_ptr.vmem [resolvable:$true] %s99
          %102 = dma.hbm_to_vmem [thread:$0]  %s97, 1024, %s100, %s88
        $region20: #{tpu_custom_call.1} parent=15 // pred_fallthru
          _
      $region16: #{tpu_custom_call.1} parent=5 // pred_fallthru
        _
      %p103 = scmp.le.s32.totalorder 1, %s13
      %p104 = scmp.lt.s32.totalorder %s13, 3
      %p105 = pnand %p103, %p104
      %p106 = pneg %p105
      // Predicated region
      $region21: #{tpu_custom_call.1} parent=5 // pred_check
        _
      $region22: #{tpu_custom_call.1} parent=5 // pred_check_branch
        %108 = sbr.rel (%p105) target = $region24
      $region23: #{tpu_custom_call.1} parent=5 // pred_region
        %s109 = ssub.s32 %s13, 1
        %s110 = sand.u32 %s26, 1
        %s111 = scalar_lea.sflag [#allocation3], %s110
        %s112 = sand.u32 %s26, 1
        %s113 = smul.addr %s112, 64
        %s114 = scalar_lea.vmem [#allocation2], %s113
        // Predicated region
        $region25: #{tpu_custom_call.1} parent=23 // pred_check
          %p115 = pneg %p39
        $region26: #{tpu_custom_call.1} parent=23 // pred_check_branch
          %117 = sbr.rel (%p115) target = $region28
        $region27: #{tpu_custom_call.1} parent=23 // pred_region
          %118 = dma.done %s111, 1024
        $region28: #{tpu_custom_call.1} parent=23 // pred_fallthru
          _
        %s119 = sand.u32 %s26, 1
        %s120 = scalar_lea.sflag [#allocation3], %s119
        %s121 = sand.u32 %s26, 1
        %s122 = smul.addr %s121, 64
        %s123 = scalar_lea.vmem [#allocation2], %s122
        %p124 = pneg %p39
        %p125 = pneg %p36
        %p126 = pneg %p65
        %p127 = pneg %p62
        %s128 = sand.u32 %s52, 1
        %s129 = scalar_lea.sflag [#allocation4], %s128
        %s130 = sand.u32 %s52, 1
        %s131 = smul.addr %s130, 64
        %s132 = scalar_lea.vmem [#allocation5], %s131
        %v133 = vld [vmem:[%s114] sm:$0xff]
        %v134 = vld [vmem:[%s114 + $0x8] sm:$0xff]
        %v135 = vld [vmem:[%s114 + $0x10] sm:$0xff]
        %v136 = vld [vmem:[%s114 + $0x18] sm:$0xff]
        %v137 = vld [vmem:[%s114 + $0x20] sm:$0xff]
        %v138 = vld [vmem:[%s114 + $0x28] sm:$0xff]
        %v139 = vld [vmem:[%s114 + $0x30] sm:$0xff]
        %v140 = vld [vmem:[%s114 + $0x38] sm:$0xff]
        %141 = vrot.lane.b32.xlu0 %v133, 1
        %v142 = vpop.permute.xlu0 %141
        %143 = vrot.lane.b32.xlu0 %v134, 1
        %v144 = vpop.permute.xlu0 %143
        %145 = vrot.lane.b32.xlu0 %v135, 1
        %v146 = vpop.permute.xlu0 %145
        %147 = vrot.lane.b32.xlu0 %v136, 1
        %v148 = vpop.permute.xlu0 %147
        %149 = vrot.lane.b32.xlu0 %v137, 1
        %v150 = vpop.permute.xlu0 %149
        %151 = vrot.lane.b32.xlu0 %v138, 1
        %v152 = vpop.permute.xlu0 %151
        %153 = vrot.lane.b32.xlu0 %v139, 1
        %v154 = vpop.permute.xlu0 %153
        %155 = vrot.lane.b32.xlu0 %v140, 1
        %v156 = vpop.permute.xlu0 %155
        %v157 = vlaneseq
        %v158 = vand.u32 %v157, 127
        %vm159 = vcmp.lt.s32.totalorder %v158, 1
        %v160 = vsel %vm159, %v154, %v156
        %v161 = vsel %vm159, %v152, %v154
        %v162 = vsel %vm159, %v150, %v152
        %v163 = vsel %vm159, %v148, %v150
        %v164 = vsel %vm159, %v146, %v148
        %v165 = vsel %vm159, %v144, %v146
        %v166 = vsel %vm159, %v142, %v144
        %v167 = vsel %vm159, %v156, %v142
        %v168 = vmul.f32 %v167, 0.97
        %v169 = vmul.f32 %v166, 0.97
        %v170 = vmul.f32 %v165, 0.97
        %v171 = vmul.f32 %v164, 0.97
        %v172 = vmul.f32 %v163, 0.97
        %v173 = vmul.f32 %v162, 0.97
        %v174 = vmul.f32 %v161, 0.97
        %v175 = vmul.f32 %v160, 0.97
        %v176 = vsub.f32 %v133, %v168
        %v177 = vsub.f32 %v134, %v169
        %v178 = vsub.f32 %v135, %v170
        %v179 = vsub.f32 %v136, %v171
        %v180 = vsub.f32 %v137, %v172
        %v181 = vsub.f32 %v138, %v173
        %v182 = vsub.f32 %v139, %v174
        %v183 = vsub.f32 %v140, %v175
        %184 = vst [vmem:[%s132] sm:$0xff] %v176
        %185 = vst [vmem:[%s132 + $0x8] sm:$0xff] %v177
        %186 = vst [vmem:[%s132 + $0x10] sm:$0xff] %v178
        %187 = vst [vmem:[%s132 + $0x18] sm:$0xff] %v179
        %188 = vst [vmem:[%s132 + $0x20] sm:$0xff] %v180
        %189 = vst [vmem:[%s132 + $0x28] sm:$0xff] %v181
        %190 = vst [vmem:[%s132 + $0x30] sm:$0xff] %v182
        %191 = vst [vmem:[%s132 + $0x38] sm:$0xff] %v183
        %v192 = vmul.f32 %v133, 0.97
        %194 = vrot.lane.b32.xlu0 %v192, 127
        %v195 = vpop.permute.xlu0 %194
        %v197 = vsub.f32 %v133, %v195
        %vm198 = vcmask 7168
        %199 = vst.msk [vmem:[%s132] sm:$0xff] %vm198, %v197
        %s200 = sand.u32 %s52, 1
        %s201 = scalar_lea.sflag [#allocation4], %s200
        %s202 = sand.u32 %s52, 1
        %s203 = smul.addr %s202, 64
        %s204 = scalar_lea.vmem [#allocation5], %s203
        // Predicated region
        $region29: #{tpu_custom_call.1} parent=23 // pred_check
          %p205 = pneg %p62
        $region30: #{tpu_custom_call.1} parent=23 // pred_check_branch
          %207 = sbr.rel (%p205) target = $region32
        $region31: #{tpu_custom_call.1} parent=23 // pred_region
          %s209 = ssub.s32 1024, 1024
          %210 = vsyncadd %s201, %s209
          %s211 = smul.addr %s18, 8
          %s212 = smul.addr %s211, 128
          %s213 = scalar_lea.hbm %s1, %s212
          %s215 = sshll.u32 %s204, 4
          %s216 = int_to_ptr.vmem [resolvable:$true] %s215
          %218 = dma.vmem_to_hbm [thread:$0]  %s216, 1024, %s213, %s201
        $region32: #{tpu_custom_call.1} parent=23 // pred_fallthru
          _
      $region24: #{tpu_custom_call.1} parent=5 // pred_fallthru
        _
      %p219 = scmp.le.s32.totalorder 2, %s13
      // Predicated region
      $region33: #{tpu_custom_call.1} parent=5 // pred_check
        %p220 = pneg %p219
      $region34: #{tpu_custom_call.1} parent=5 // pred_check_branch
        %222 = sbr.rel (%p220) target = $region36
      $region35: #{tpu_custom_call.1} parent=5 // pred_region
        %s223 = ssub.s32 %s13, 2
        // Predicated region
        $region37: #{tpu_custom_call.1} parent=35 // pred_check
          %p224 = pneg %p68
        $region38: #{tpu_custom_call.1} parent=35 // pred_check_branch
          %226 = sbr.rel (%p224) target = $region40
        $region39: #{tpu_custom_call.1} parent=35 // pred_region
          %s227 = sand.u32 %s53, 1
          %s228 = scalar_lea.sflag [#allocation4], %s227
          %s229 = sand.u32 %s53, 1
          %s230 = smul.addr %s229, 64
          %s231 = scalar_lea.vmem [#allocation5], %s230
          %232 = dma.done %s228, 1024
        $region40: #{tpu_custom_call.1} parent=35 // pred_fallthru
          _
      $region36: #{tpu_custom_call.1} parent=5 // pred_fallthru
        _
    $region6: #{tpu_custom_call.1} parent=1 // loop_footer
      %s17 = sadd.s32 1, %s13
    $region7: #{tpu_custom_call.1} parent=1 // loop_footer_branch
      %12 = sbr.rel target = $region3
    $region8: #{tpu_custom_call.1} parent=1 // loop_exit
      _
    %233 = vsyncpa [#allocation3], 1
    %s234 = scalar_lea.sflag [#allocation3], 1
    %235 = vsyncpa %s234, 1
    %236 = vsyncpa [#allocation4], 1
    %s237 = scalar_lea.sflag [#allocation4], 1
    %238 = vsyncpa %s237, 1

</llo_original>
